<compile_context>
chip_gen: v5e
topology: v5e:2x2
jax: 0.10.0
libtpu: 0.0.40
codegen_flags: <defaults>
</compile_context>

<pallas_src>
import functools

import jax
import jax.numpy as jnp
import numpy as np
from jax.experimental import pallas as pl
from jax.experimental.pallas import tpu as pltpu


# ----------------------------- Pallas kernel -----------------------------

def tbcnn_kernel(tree_ref, coef_ref, wfused_ref, bconv_ref, wlin_ref, blin_ref,
                 out_ref, *, n_nodes, bblk):
    # tree_ref  : [C+1, R, F]    f32   (R = bblk * n_nodes, rows batch-major)
    # coef_ref  : [3, C+1, R, 1] f32   (eta_t / eta_r / eta_l)
    # wfused_ref: [3F, CFp]      bf16  (fused per-plane conv weight, CF zero-padded)
    # bconv_ref : [1, CFp]       f32
    # wlin_ref  : [CFp, H]       bf16  (hidden2label weight, CF rows zero-padded)
    # blin_ref  : [1, H]         f32
    # out_ref   : [1, bblk, H]   f32
    c1 = tree_ref.shape[0]

    # Weighted child sum as C+1 unrolled VPU FMAs per plane (no sublane reduce).
    res_parts = []
    for t in range(3):
        acc = tree_ref[0] * coef_ref[t, 0]                 # [R, F] * [R, 1]
        for c in range(1, c1):
            acc = acc + tree_ref[c] * coef_ref[t, c]
        res_parts.append(acc)
    res_all = jnp.concatenate(res_parts, axis=-1)          # [R, 3F] f32

    # One fused K=3F MXU push (bf16 operands, f32 accumulation).
    conv = jnp.dot(res_all.astype(jnp.bfloat16), wfused_ref[...],
                   preferred_element_type=jnp.float32)     # [R, CFp]
    conv = jnp.tanh(conv + bconv_ref[...])                 # f32 bias + tanh (EUP)

    # Max-pool over the N nodes of each batch element in this block.
    cfp = conv.shape[-1]
    if bblk == 1:
        pooled = jnp.max(conv, axis=0, keepdims=True)                        # [1, CFp]
    elif n_nodes % 8 == 0:
        pooled = jnp.max(conv.reshape(bblk, n_nodes, cfp), axis=1)           # [bblk, CFp]
    else:
        pooled = jnp.concatenate(
            [jnp.max(conv[b * n_nodes:(b + 1) * n_nodes, :], axis=0, keepdims=True)
             for b in range(bblk)], axis=0)                                  # [bblk, CFp]

    # hidden2label, batched over the block; output is lane-dense [bblk, 128].
    out = jnp.dot(pooled.astype(jnp.bfloat16), wlin_ref[...],
                  preferred_element_type=jnp.float32) + blin_ref[...]
    out_ref[0] = out


def _pick_bblk(B, N, target_rows=256):
    """Batch elements per grid step: ~target_rows rows/step, keep >=2 steps when B allows
    (v7x dual TensorCore), and satisfy the (8,128) block constraint on the row axis."""
    bblk = max(1, min(B, target_rows // max(N, 1)))
    if B >= 2:
        bblk = max(1, min(bblk, B // 2))
    while B % bblk:
        bblk -= 1
    if (bblk * N) % 8 != 0 and bblk != B:
        bblk = B  # full-extent row block is always legal
    return bblk


def tbcnn_forward_pallas(tree, coef, wstack, b_conv, w_lin_t, b_lin):
    """tree: [B,N,C+1,F]; coef: [B,N,C+1,3]; wstack: [3,F,CF] (already permuted to
    reproduce the original reshape semantics); w_lin_t: [CF,H]; b_conv: [CF]; b_lin: [H]."""
    B, N, C1, F = tree.shape
    CF = wstack.shape[2]
    H = w_lin_t.shape[1]
    CFp = ((CF + 127) // 128) * 128          # lane-dense conv feature width
    assert H % 128 == 0, "hidden2label width is 128 in the model (lane-dense)"

    bblk = _pick_bblk(B, N)
    R = bblk * N
    nblk = B // bblk

    # FMA-friendly layouts: child axis leads, node rows on sublanes, F on lanes.
    tree_r = jnp.transpose(tree, (2, 0, 1, 3)).reshape(C1, B * N, F).astype(jnp.float32)
    coef_r = jnp.transpose(coef, (3, 2, 0, 1)).reshape(3, C1, B * N, 1).astype(jnp.float32)

    # Fused conv weight [3F, CF] -> zero-pad CF to CFp, bf16 MXU operand.
    wfused = jnp.pad(wstack.reshape(3 * F, CF), ((0, 0), (0, CFp - CF))).astype(jnp.bfloat16)
    bconv_p = jnp.pad(b_conv.reshape(1, CF), ((0, 0), (0, CFp - CF))).astype(jnp.float32)
    wlin_p = jnp.pad(w_lin_t, ((0, CFp - CF), (0, 0))).astype(jnp.bfloat16)
    blin_p = b_lin.reshape(1, H).astype(jnp.float32)

    kernel = functools.partial(tbcnn_kernel, n_nodes=N, bblk=bblk)
    out = pl.pallas_call(
        kernel,
        out_shape=jax.ShapeDtypeStruct((nblk, bblk, H), jnp.float32),
        grid_spec=pltpu.PrefetchScalarGridSpec(
            num_scalar_prefetch=0,
            grid=(nblk,),
            in_specs=[
                pl.BlockSpec((C1, R, F), lambda i: (0, i, 0)),
                pl.BlockSpec((3, C1, R, 1), lambda i: (0, 0, i, 0)),
                pl.BlockSpec((3 * F, CFp), lambda i: (0, 0)),   # constant-index: VMEM-resident
                pl.BlockSpec((1, CFp), lambda i: (0, 0)),
                pl.BlockSpec((CFp, H), lambda i: (0, 0)),
                pl.BlockSpec((1, H), lambda i: (0, 0)),
            ],
            out_specs=pl.BlockSpec((1, bblk, H), lambda i: (i, 0, 0)),
        ),
        compiler_params=pltpu.CompilerParams(dimension_semantics=("parallel",)),
    )(tree_r, coef_r, wfused, bconv_p, wlin_p, blin_p)
    return out.reshape(B, H)


# --------------- plain-JAX glue (gathers, eta coefficients, reference) ---------------

def children_tensor_jax(nodes, children):
    """children_tensor(): per-batch lookup; child index 0 maps to a zero vector."""
    B, N, F = nodes.shape
    vlookup = jnp.concatenate([jnp.zeros((B, 1, F), nodes.dtype), nodes[:, 1:, :]], axis=1)
    # TODO(synk): data-dependent per-batch gather (gather_nd) kept in plain JAX; no clean BlockSpec form.
    return jax.vmap(lambda vl, ch: vl[ch])(vlookup, children)       # [B, N, C, F]


def compute_coef(children):
    """eta_t / eta_r / eta_l stacked as in conv_step -> [B, N, C+1, 3]."""
    ch = children.astype(jnp.float32)
    B, N, C = ch.shape
    c_t = jnp.broadcast_to(
        jnp.concatenate([jnp.ones((N, 1)), jnp.zeros((N, C))], axis=1)[None], (B, N, C + 1))
    mask = jnp.concatenate([jnp.zeros((B, N, 1)), jnp.minimum(ch, 1.0)], axis=2)
    num_sib = jnp.sum((ch != 0).astype(jnp.float32), axis=2, keepdims=True)
    num_sib = jnp.broadcast_to(num_sib, (B, N, C + 1))
    child_idx = jnp.arange(-1.0, float(C), 1.0)[None, None, :] * mask
    singles = jnp.concatenate(
        [jnp.zeros((B, N, 1)), jnp.full((B, N, 1), 0.5), jnp.zeros((B, N, C - 1))], axis=2)
    # safe denominator: values in the num_sib==1 branch are masked by the where, but keep
    # them finite so a future grad through this host-side code is not poisoned.
    denom = jnp.maximum(num_sib - 1.0, 1.0)
    c_r = jnp.where(num_sib == 1.0, singles, (1.0 - c_t) * (child_idx / denom))
    c_l = (1.0 - c_t) * (1.0 - c_r) * mask
    return jnp.stack([c_t, c_r, c_l], axis=3)


def tbcnn_reference(emb_table, node, children, w_t, w_l, w_r, b_conv, w_lin, b_lin):
    """Literal pure-JAX transcription of the PyTorch forward (for checking)."""
    nodes = emb_table[node]                                         # [B, N, F]
    B, N, F = nodes.shape
    C = children.shape[2]
    cv = children_tensor_jax(nodes, children)
    tree = jnp.concatenate([nodes[:, :, None, :], cv], axis=2)      # [B, N, C+1, F]
    coef = compute_coef(children)                                   # [B, N, C+1, 3]
    X = B * N
    res = jnp.matmul(jnp.transpose(tree.reshape(X, C + 1, F), (0, 2, 1)),
                     coef.reshape(X, C + 1, 3))                     # [X, F, 3]
    res = res.reshape(B, N, 3, F)                                   # literal reinterpreting reshape
    W = jnp.stack([w_t, w_r, w_l], axis=0)                          # [3, F, CF]
    conv = jnp.tanh(jnp.tensordot(res, W, axes=[[2, 3], [0, 1]]) + b_conv)
    pooled = jnp.max(conv, axis=1)                                  # [B, CF]
    return pooled @ w_lin.T + b_lin                                 # [B, 128]


if __name__ == "__main__":
    B, N, C = 2, 16, 4           # batch, max_tree_size, max_children
    F, CF, H = 32, 32, 128       # feature_size (= embedding_dim), conv_feature, hidden2label out
    vocab = 50

    key = jax.random.PRNGKey(0)
    k = jax.random.split(key, 10)
    emb_table = 0.1 * jax.random.normal(k[0], (vocab + 1, F), jnp.float32)
    emb_table = emb_table.at[0].set(0.0)                 # nn.Embedding padding_idx=0
    w_t = 0.1 * jax.random.normal(k[1], (F, CF), jnp.float32)
    w_l = 0.1 * jax.random.normal(k[2], (F, CF), jnp.float32)
    w_r = 0.1 * jax.random.normal(k[3], (F, CF), jnp.float32)
    b_conv = 0.1 * jax.random.normal(k[4], (CF,), jnp.float32)
    w_lin = 0.1 * jax.random.normal(k[5], (H, CF), jnp.float32)   # nn.Linear weight [out, in]
    b_lin = 0.1 * jax.random.normal(k[6], (H,), jnp.float32)
    # w_h / b_h / dropout are defined in __init__ but unused in forward -> omitted.

    node = jax.random.randint(k[7], (B, N), 0, vocab + 1)
    children = jax.random.randint(k[8], (B, N, C), 0, N)

    # glue: embedding lookup, child gather, eta coefficients (host-side JAX)
    nodes = emb_table[node]                                         # [B, N, F]
    cv = children_tensor_jax(nodes, children)                       # [B, N, C, F]
    tree = jnp.concatenate([nodes[:, :, None, :], cv], axis=2)      # [B, N, C+1, F]
    coef = compute_coef(children)                                   # [B, N, C+1, 3]

    # DELIBERATE: reproduce the original reshape([X,F,3] -> [B,N,3,F]) flat-index
    # reinterpretation + tensordot semantics via this weight permutation. Do not "fix".
    W = jnp.stack([w_t, w_r, w_l], axis=0)                          # [3, F, CF]
    Wp = W.reshape(3 * F, CF).reshape(F, 3, CF)
    wstack = jnp.transpose(Wp, (1, 0, 2))                           # [3, F, CF]

    out = tbcnn_forward_pallas(tree, coef, wstack, b_conv, w_lin.T, b_lin)
    out = jax.block_until_ready(out)

    ref = tbcnn_reference(emb_table, node, children, w_t, w_l, w_r, b_conv, w_lin, b_lin)
    assert out.shape == (B, H)
    # bf16 MXU operands (f32 accumulation) -> slightly relaxed tolerance vs. pure-f32 ref.
    np.testing.assert_allclose(np.asarray(out), np.asarray(ref), atol=2e-2, rtol=2e-2)
    print("KERNEL_OK")
</pallas_src>

<mosaic_0001>
module attributes {stable_mosaic.version = 11 : i64} {
  func.func @tbcnn_kernel(%arg0: i32, %arg1: memref<5x16x32xf32, #tpu.memory_space<vmem>>, %arg2: memref<3x5x16x1xf32, #tpu.memory_space<vmem>>, %arg3: memref<96x128xbf16, #tpu.memory_space<vmem>>, %arg4: memref<1x128xf32, #tpu.memory_space<vmem>>, %arg5: memref<128x128xbf16, #tpu.memory_space<vmem>>, %arg6: memref<1x128xf32, #tpu.memory_space<vmem>>, %arg7: memref<1x1x128xf32, #tpu.memory_space<vmem>>) attributes {dimension_semantics = [#tpu.dimension_semantics<parallel>], iteration_bounds = array<i64: 2>, scalar_prefetch = 0 : i64, scratch_operands = 0 : i64, tpu.core_type = #tpu.core_type<tc>, window_params = [{transform_indices = @transform_0, window_bounds = array<i64: 5, 16, 32>}, {transform_indices = @transform_1, window_bounds = array<i64: 3, 5, 16, 1>}, {pipeline_mode = #tpu.pipeline_mode<synchronous>, transform_indices = @transform_2, window_bounds = array<i64: 96, 128>}, {pipeline_mode = #tpu.pipeline_mode<synchronous>, transform_indices = @transform_3, window_bounds = array<i64: 1, 128>}, {pipeline_mode = #tpu.pipeline_mode<synchronous>, transform_indices = @transform_4, window_bounds = array<i64: 128, 128>}, {pipeline_mode = #tpu.pipeline_mode<synchronous>, transform_indices = @transform_5, window_bounds = array<i64: 1, 128>}, {transform_indices = @transform_6, window_bounds = array<i64: 1, 1, 128>}]} {
    %c0 = arith.constant 0 : index
    %c0_0 = arith.constant 0 : index
    %c0_1 = arith.constant 0 : index
    %0 = vector.load %arg1[%c0, %c0_0, %c0_1] : memref<5x16x32xf32, #tpu.memory_space<vmem>>, vector<1x16x32xf32>
    %1 = vector.shape_cast %0 : vector<1x16x32xf32> to vector<16x32xf32>
    %c0_2 = arith.constant 0 : index
    %c0_3 = arith.constant 0 : index
    %c0_4 = arith.constant 0 : index
    %c0_5 = arith.constant 0 : index
    %2 = vector.load %arg2[%c0_2, %c0_3, %c0_4, %c0_5] : memref<3x5x16x1xf32, #tpu.memory_space<vmem>>, vector<1x1x16x1xf32>
    %3 = vector.shape_cast %2 : vector<1x1x16x1xf32> to vector<16x1xf32>
    %4 = vector.broadcast %3 : vector<16x1xf32> to vector<16x32xf32>
    %5 = arith.mulf %1, %4 : vector<16x32xf32>
    %c1 = arith.constant 1 : index
    %c0_6 = arith.constant 0 : index
    %c0_7 = arith.constant 0 : index
    %6 = vector.load %arg1[%c1, %c0_6, %c0_7] : memref<5x16x32xf32, #tpu.memory_space<vmem>>, vector<1x16x32xf32>
    %7 = vector.shape_cast %6 : vector<1x16x32xf32> to vector<16x32xf32>
    %c0_8 = arith.constant 0 : index
    %c1_9 = arith.constant 1 : index
    %c0_10 = arith.constant 0 : index
    %c0_11 = arith.constant 0 : index
    %8 = vector.load %arg2[%c0_8, %c1_9, %c0_10, %c0_11] : memref<3x5x16x1xf32, #tpu.memory_space<vmem>>, vector<1x1x16x1xf32>
    %9 = vector.shape_cast %8 : vector<1x1x16x1xf32> to vector<16x1xf32>
    %10 = vector.broadcast %9 : vector<16x1xf32> to vector<16x32xf32>
    %11 = arith.mulf %7, %10 : vector<16x32xf32>
    %12 = arith.addf %5, %11 : vector<16x32xf32>
    %c2 = arith.constant 2 : index
    %c0_12 = arith.constant 0 : index
    %c0_13 = arith.constant 0 : index
    %13 = vector.load %arg1[%c2, %c0_12, %c0_13] : memref<5x16x32xf32, #tpu.memory_space<vmem>>, vector<1x16x32xf32>
    %14 = vector.shape_cast %13 : vector<1x16x32xf32> to vector<16x32xf32>
    %c0_14 = arith.constant 0 : index
    %c2_15 = arith.constant 2 : index
    %c0_16 = arith.constant 0 : index
    %c0_17 = arith.constant 0 : index
    %15 = vector.load %arg2[%c0_14, %c2_15, %c0_16, %c0_17] : memref<3x5x16x1xf32, #tpu.memory_space<vmem>>, vector<1x1x16x1xf32>
    %16 = vector.shape_cast %15 : vector<1x1x16x1xf32> to vector<16x1xf32>
    %17 = vector.broadcast %16 : vector<16x1xf32> to vector<16x32xf32>
    %18 = arith.mulf %14, %17 : vector<16x32xf32>
    %19 = arith.addf %12, %18 : vector<16x32xf32>
    %c3 = arith.constant 3 : index
    %c0_18 = arith.constant 0 : index
    %c0_19 = arith.constant 0 : index
    %20 = vector.load %arg1[%c3, %c0_18, %c0_19] : memref<5x16x32xf32, #tpu.memory_space<vmem>>, vector<1x16x32xf32>
    %21 = vector.shape_cast %20 : vector<1x16x32xf32> to vector<16x32xf32>
    %c0_20 = arith.constant 0 : index
    %c3_21 = arith.constant 3 : index
    %c0_22 = arith.constant 0 : index
    %c0_23 = arith.constant 0 : index
    %22 = vector.load %arg2[%c0_20, %c3_21, %c0_22, %c0_23] : memref<3x5x16x1xf32, #tpu.memory_space<vmem>>, vector<1x1x16x1xf32>
    %23 = vector.shape_cast %22 : vector<1x1x16x1xf32> to vector<16x1xf32>
    %24 = vector.broadcast %23 : vector<16x1xf32> to vector<16x32xf32>
    %25 = arith.mulf %21, %24 : vector<16x32xf32>
    %26 = arith.addf %19, %25 : vector<16x32xf32>
    %c4 = arith.constant 4 : index
    %c0_24 = arith.constant 0 : index
    %c0_25 = arith.constant 0 : index
    %27 = vector.load %arg1[%c4, %c0_24, %c0_25] : memref<5x16x32xf32, #tpu.memory_space<vmem>>, vector<1x16x32xf32>
    %28 = vector.shape_cast %27 : vector<1x16x32xf32> to vector<16x32xf32>
    %c0_26 = arith.constant 0 : index
    %c4_27 = arith.constant 4 : index
    %c0_28 = arith.constant 0 : index
    %c0_29 = arith.constant 0 : index
    %29 = vector.load %arg2[%c0_26, %c4_27, %c0_28, %c0_29] : memref<3x5x16x1xf32, #tpu.memory_space<vmem>>, vector<1x1x16x1xf32>
    %30 = vector.shape_cast %29 : vector<1x1x16x1xf32> to vector<16x1xf32>
    %31 = vector.broadcast %30 : vector<16x1xf32> to vector<16x32xf32>
    %32 = arith.mulf %28, %31 : vector<16x32xf32>
    %33 = arith.addf %26, %32 : vector<16x32xf32>
    %c0_30 = arith.constant 0 : index
    %c0_31 = arith.constant 0 : index
    %c0_32 = arith.constant 0 : index
    %34 = vector.load %arg1[%c0_30, %c0_31, %c0_32] : memref<5x16x32xf32, #tpu.memory_space<vmem>>, vector<1x16x32xf32>
    %35 = vector.shape_cast %34 : vector<1x16x32xf32> to vector<16x32xf32>
    %c1_33 = arith.constant 1 : index
    %c0_34 = arith.constant 0 : index
    %c0_35 = arith.constant 0 : index
    %c0_36 = arith.constant 0 : index
    %36 = vector.load %arg2[%c1_33, %c0_34, %c0_35, %c0_36] : memref<3x5x16x1xf32, #tpu.memory_space<vmem>>, vector<1x1x16x1xf32>
    %37 = vector.shape_cast %36 : vector<1x1x16x1xf32> to vector<16x1xf32>
    %38 = vector.broadcast %37 : vector<16x1xf32> to vector<16x32xf32>
    %39 = arith.mulf %35, %38 : vector<16x32xf32>
    %c1_37 = arith.constant 1 : index
    %c0_38 = arith.constant 0 : index
    %c0_39 = arith.constant 0 : index
    %40 = vector.load %arg1[%c1_37, %c0_38, %c0_39] : memref<5x16x32xf32, #tpu.memory_space<vmem>>, vector<1x16x32xf32>
    %41 = vector.shape_cast %40 : vector<1x16x32xf32> to vector<16x32xf32>
    %c1_40 = arith.constant 1 : index
    %c1_41 = arith.constant 1 : index
    %c0_42 = arith.constant 0 : index
    %c0_43 = arith.constant 0 : index
    %42 = vector.load %arg2[%c1_40, %c1_41, %c0_42, %c0_43] : memref<3x5x16x1xf32, #tpu.memory_space<vmem>>, vector<1x1x16x1xf32>
    %43 = vector.shape_cast %42 : vector<1x1x16x1xf32> to vector<16x1xf32>
    %44 = vector.broadcast %43 : vector<16x1xf32> to vector<16x32xf32>
    %45 = arith.mulf %41, %44 : vector<16x32xf32>
    %46 = arith.addf %39, %45 : vector<16x32xf32>
    %c2_44 = arith.constant 2 : index
    %c0_45 = arith.constant 0 : index
    %c0_46 = arith.constant 0 : index
    %47 = vector.load %arg1[%c2_44, %c0_45, %c0_46] : memref<5x16x32xf32, #tpu.memory_space<vmem>>, vector<1x16x32xf32>
    %48 = vector.shape_cast %47 : vector<1x16x32xf32> to vector<16x32xf32>
    %c1_47 = arith.constant 1 : index
    %c2_48 = arith.constant 2 : index
    %c0_49 = arith.constant 0 : index
    %c0_50 = arith.constant 0 : index
    %49 = vector.load %arg2[%c1_47, %c2_48, %c0_49, %c0_50] : memref<3x5x16x1xf32, #tpu.memory_space<vmem>>, vector<1x1x16x1xf32>
    %50 = vector.shape_cast %49 : vector<1x1x16x1xf32> to vector<16x1xf32>
    %51 = vector.broadcast %50 : vector<16x1xf32> to vector<16x32xf32>
    %52 = arith.mulf %48, %51 : vector<16x32xf32>
    %53 = arith.addf %46, %52 : vector<16x32xf32>
    %c3_51 = arith.constant 3 : index
    %c0_52 = arith.constant 0 : index
    %c0_53 = arith.constant 0 : index
    %54 = vector.load %arg1[%c3_51, %c0_52, %c0_53] : memref<5x16x32xf32, #tpu.memory_space<vmem>>, vector<1x16x32xf32>
    %55 = vector.shape_cast %54 : vector<1x16x32xf32> to vector<16x32xf32>
    %c1_54 = arith.constant 1 : index
    %c3_55 = arith.constant 3 : index
    %c0_56 = arith.constant 0 : index
    %c0_57 = arith.constant 0 : index
    %56 = vector.load %arg2[%c1_54, %c3_55, %c0_56, %c0_57] : memref<3x5x16x1xf32, #tpu.memory_space<vmem>>, vector<1x1x16x1xf32>
    %57 = vector.shape_cast %56 : vector<1x1x16x1xf32> to vector<16x1xf32>
    %58 = vector.broadcast %57 : vector<16x1xf32> to vector<16x32xf32>
    %59 = arith.mulf %55, %58 : vector<16x32xf32>
    %60 = arith.addf %53, %59 : vector<16x32xf32>
    %c4_58 = arith.constant 4 : index
    %c0_59 = arith.constant 0 : index
    %c0_60 = arith.constant 0 : index
    %61 = vector.load %arg1[%c4_58, %c0_59, %c0_60] : memref<5x16x32xf32, #tpu.memory_space<vmem>>, vector<1x16x32xf32>
    %62 = vector.shape_cast %61 : vector<1x16x32xf32> to vector<16x32xf32>
    %c1_61 = arith.constant 1 : index
    %c4_62 = arith.constant 4 : index
    %c0_63 = arith.constant 0 : index
    %c0_64 = arith.constant 0 : index
    %63 = vector.load %arg2[%c1_61, %c4_62, %c0_63, %c0_64] : memref<3x5x16x1xf32, #tpu.memory_space<vmem>>, vector<1x1x16x1xf32>
    %64 = vector.shape_cast %63 : vector<1x1x16x1xf32> to vector<16x1xf32>
    %65 = vector.broadcast %64 : vector<16x1xf32> to vector<16x32xf32>
    %66 = arith.mulf %62, %65 : vector<16x32xf32>
    %67 = arith.addf %60, %66 : vector<16x32xf32>
    %c0_65 = arith.constant 0 : index
    %c0_66 = arith.constant 0 : index
    %c0_67 = arith.constant 0 : index
    %68 = vector.load %arg1[%c0_65, %c0_66, %c0_67] : memref<5x16x32xf32, #tpu.memory_space<vmem>>, vector<1x16x32xf32>
    %69 = vector.shape_cast %68 : vector<1x16x32xf32> to vector<16x32xf32>
    %c2_68 = arith.constant 2 : index
    %c0_69 = arith.constant 0 : index
    %c0_70 = arith.constant 0 : index
    %c0_71 = arith.constant 0 : index
    %70 = vector.load %arg2[%c2_68, %c0_69, %c0_70, %c0_71] : memref<3x5x16x1xf32, #tpu.memory_space<vmem>>, vector<1x1x16x1xf32>
    %71 = vector.shape_cast %70 : vector<1x1x16x1xf32> to vector<16x1xf32>
    %72 = vector.broadcast %71 : vector<16x1xf32> to vector<16x32xf32>
    %73 = arith.mulf %69, %72 : vector<16x32xf32>
    %c1_72 = arith.constant 1 : index
    %c0_73 = arith.constant 0 : index
    %c0_74 = arith.constant 0 : index
    %74 = vector.load %arg1[%c1_72, %c0_73, %c0_74] : memref<5x16x32xf32, #tpu.memory_space<vmem>>, vector<1x16x32xf32>
    %75 = vector.shape_cast %74 : vector<1x16x32xf32> to vector<16x32xf32>
    %c2_75 = arith.constant 2 : index
    %c1_76 = arith.constant 1 : index
    %c0_77 = arith.constant 0 : index
    %c0_78 = arith.constant 0 : index
    %76 = vector.load %arg2[%c2_75, %c1_76, %c0_77, %c0_78] : memref<3x5x16x1xf32, #tpu.memory_space<vmem>>, vector<1x1x16x1xf32>
    %77 = vector.shape_cast %76 : vector<1x1x16x1xf32> to vector<16x1xf32>
    %78 = vector.broadcast %77 : vector<16x1xf32> to vector<16x32xf32>
    %79 = arith.mulf %75, %78 : vector<16x32xf32>
    %80 = arith.addf %73, %79 : vector<16x32xf32>
    %c2_79 = arith.constant 2 : index
    %c0_80 = arith.constant 0 : index
    %c0_81 = arith.constant 0 : index
    %81 = vector.load %arg1[%c2_79, %c0_80, %c0_81] : memref<5x16x32xf32, #tpu.memory_space<vmem>>, vector<1x16x32xf32>
    %82 = vector.shape_cast %81 : vector<1x16x32xf32> to vector<16x32xf32>
    %c2_82 = arith.constant 2 : index
    %c2_83 = arith.constant 2 : index
    %c0_84 = arith.constant 0 : index
    %c0_85 = arith.constant 0 : index
    %83 = vector.load %arg2[%c2_82, %c2_83, %c0_84, %c0_85] : memref<3x5x16x1xf32, #tpu.memory_space<vmem>>, vector<1x1x16x1xf32>
    %84 = vector.shape_cast %83 : vector<1x1x16x1xf32> to vector<16x1xf32>
    %85 = vector.broadcast %84 : vector<16x1xf32> to vector<16x32xf32>
    %86 = arith.mulf %82, %85 : vector<16x32xf32>
    %87 = arith.addf %80, %86 : vector<16x32xf32>
    %c3_86 = arith.constant 3 : index
    %c0_87 = arith.constant 0 : index
    %c0_88 = arith.constant 0 : index
    %88 = vector.load %arg1[%c3_86, %c0_87, %c0_88] : memref<5x16x32xf32, #tpu.memory_space<vmem>>, vector<1x16x32xf32>
    %89 = vector.shape_cast %88 : vector<1x16x32xf32> to vector<16x32xf32>
    %c2_89 = arith.constant 2 : index
    %c3_90 = arith.constant 3 : index
    %c0_91 = arith.constant 0 : index
    %c0_92 = arith.constant 0 : index
    %90 = vector.load %arg2[%c2_89, %c3_90, %c0_91, %c0_92] : memref<3x5x16x1xf32, #tpu.memory_space<vmem>>, vector<1x1x16x1xf32>
    %91 = vector.shape_cast %90 : vector<1x1x16x1xf32> to vector<16x1xf32>
    %92 = vector.broadcast %91 : vector<16x1xf32> to vector<16x32xf32>
    %93 = arith.mulf %89, %92 : vector<16x32xf32>
    %94 = arith.addf %87, %93 : vector<16x32xf32>
    %c4_93 = arith.constant 4 : index
    %c0_94 = arith.constant 0 : index
    %c0_95 = arith.constant 0 : index
    %95 = vector.load %arg1[%c4_93, %c0_94, %c0_95] : memref<5x16x32xf32, #tpu.memory_space<vmem>>, vector<1x16x32xf32>
    %96 = vector.shape_cast %95 : vector<1x16x32xf32> to vector<16x32xf32>
    %c2_96 = arith.constant 2 : index
    %c4_97 = arith.constant 4 : index
    %c0_98 = arith.constant 0 : index
    %c0_99 = arith.constant 0 : index
    %97 = vector.load %arg2[%c2_96, %c4_97, %c0_98, %c0_99] : memref<3x5x16x1xf32, #tpu.memory_space<vmem>>, vector<1x1x16x1xf32>
    %98 = vector.shape_cast %97 : vector<1x1x16x1xf32> to vector<16x1xf32>
    %99 = vector.broadcast %98 : vector<16x1xf32> to vector<16x32xf32>
    %100 = arith.mulf %96, %99 : vector<16x32xf32>
    %101 = arith.addf %94, %100 : vector<16x32xf32>
    %102 = tpu.concatenate %33, %67, %101 in 1 : vector<16x32xf32>, vector<16x32xf32>, vector<16x32xf32> -> vector<16x96xf32>
    %103 = arith.truncf %102 : vector<16x96xf32> to vector<16x96xbf16>
    %c0_100 = arith.constant 0 : index
    %c0_101 = arith.constant 0 : index
    %104 = vector.load %arg3[%c0_100, %c0_101] : memref<96x128xbf16, #tpu.memory_space<vmem>>, vector<96x128xbf16>
    %cst = arith.constant dense<0.000000e+00> : vector<16x128xf32>
    %105 = tpu.matmul %103, %104, %cst {dimension_numbers = #tpu.dot_dimension_numbers<[1], [0], [0], [1], [0, 0, 1, 1], [], []>} : vector<16x96xbf16>, vector<96x128xbf16>, vector<16x128xf32> -> vector<16x128xf32>
    %c0_102 = arith.constant 0 : index
    %c0_103 = arith.constant 0 : index
    %106 = vector.load %arg4[%c0_102, %c0_103] : memref<1x128xf32, #tpu.memory_space<vmem>>, vector<1x128xf32>
    %107 = vector.broadcast %106 : vector<1x128xf32> to vector<16x128xf32>
    %108 = arith.addf %105, %107 : vector<16x128xf32>
    %109 = math.tanh %108 : vector<16x128xf32>
    %cst_104 = arith.constant dense<0xFF800000> : vector<128xf32>
    %110 = vector.multi_reduction <maximumf>, %109, %cst_104 [0] : vector<16x128xf32> to vector<128xf32>
    %111 = vector.shape_cast %110 : vector<128xf32> to vector<1x128xf32>
    %112 = arith.truncf %111 : vector<1x128xf32> to vector<1x128xbf16>
    %c0_105 = arith.constant 0 : index
    %c0_106 = arith.constant 0 : index
    %113 = vector.load %arg5[%c0_105, %c0_106] : memref<128x128xbf16, #tpu.memory_space<vmem>>, vector<128x128xbf16>
    %cst_107 = arith.constant dense<0.000000e+00> : vector<1x128xf32>
    %114 = tpu.matmul %112, %113, %cst_107 {dimension_numbers = #tpu.dot_dimension_numbers<[1], [0], [0], [1], [0, 0, 1, 1], [], []>} : vector<1x128xbf16>, vector<128x128xbf16>, vector<1x128xf32> -> vector<1x128xf32>
    %c0_108 = arith.constant 0 : index
    %c0_109 = arith.constant 0 : index
    %115 = vector.load %arg6[%c0_108, %c0_109] : memref<1x128xf32, #tpu.memory_space<vmem>>, vector<1x128xf32>
    %116 = arith.addf %114, %115 : vector<1x128xf32>
    %c0_110 = arith.constant 0 : index
    %c0_111 = arith.constant 0 : index
    %c0_112 = arith.constant 0 : index
    %117 = vector.load %arg7[%c0_110, %c0_111, %c0_112] : memref<1x1x128xf32, #tpu.memory_space<vmem>>, vector<1x1x128xf32>
    %118 = vector.shape_cast %117 : vector<1x1x128xf32> to vector<1x128xf32>
    %119 = vector.shape_cast %116 : vector<1x128xf32> to vector<1x1x128xf32>
    tpu.vector_store %arg7[%c0_110, %c0_111, %c0_112], %119 {strides = array<i32>} : memref<1x1x128xf32, #tpu.memory_space<vmem>>, vector<1x1x128xf32>,
    return
  }
  func.func @transform_0(%arg0: i32) -> (i32, i32, i32) {
    %c0_i32 = arith.constant 0 : i32
    %c0_i32_0 = arith.constant 0 : i32
    %c0_i32_1 = arith.constant 0 : i32
    return %c0_i32, %arg0, %c0_i32_0 : i32, i32, i32
  }
  func.func @transform_1(%arg0: i32) -> (i32, i32, i32, i32) {
    %c0_i32 = arith.constant 0 : i32
    %c0_i32_0 = arith.constant 0 : i32
    %c0_i32_1 = arith.constant 0 : i32
    %c0_i32_2 = arith.constant 0 : i32
    return %c0_i32, %c0_i32_0, %arg0, %c0_i32_1 : i32, i32, i32, i32
  }
  func.func @transform_2(%arg0: i32) -> (i32, i32) {
    %c0_i32 = arith.constant 0 : i32
    %c0_i32_0 = arith.constant 0 : i32
    %c0_i32_1 = arith.constant 0 : i32
    return %c0_i32, %c0_i32_0 : i32, i32
  }
  func.func @transform_3(%arg0: i32) -> (i32, i32) {
    %c0_i32 = arith.constant 0 : i32
    %c0_i32_0 = arith.constant 0 : i32
    %c0_i32_1 = arith.constant 0 : i32
    return %c0_i32, %c0_i32_0 : i32, i32
  }
  func.func @transform_4(%arg0: i32) -> (i32, i32) {
    %c0_i32 = arith.constant 0 : i32
    %c0_i32_0 = arith.constant 0 : i32
    %c0_i32_1 = arith.constant 0 : i32
    return %c0_i32, %c0_i32_0 : i32, i32
  }
  func.func @transform_5(%arg0: i32) -> (i32, i32) {
    %c0_i32 = arith.constant 0 : i32
    %c0_i32_0 = arith.constant 0 : i32
    %c0_i32_1 = arith.constant 0 : i32
    return %c0_i32, %c0_i32_0 : i32, i32
  }
  func.func @transform_6(%arg0: i32) -> (i32, i32, i32) {
    %c0_i32 = arith.constant 0 : i32
    %c0_i32_0 = arith.constant 0 : i32
    %c0_i32_1 = arith.constant 0 : i32
    return %arg0, %c0_i32, %c0_i32_0 : i32, i32, i32
  }
}

</mosaic_0001>

<llo_original>
// kernel: tpu_custom_call.1
$region0: #{tpu_custom_call.1}
  #allocation0 [shape = 'u32[]', space=smem, size = 0x4, offset = 0x4, fixed_abs, tag = 'smem constant byte address 0x4 - core index']
  #allocation1 [shape = 'u32[72,128]{1,0:T(1,128)}', space=vmem, size = 0x9000, scoped, tag = 'internal scratch']
  %s0 = inlined_call_operand.vmem [shape: f32[5,32,32], index: 0, kind: input, shape index: {}]
  %s1 = inlined_call_operand.vmem [shape: f32[3,5,32,1], index: 1, kind: input, shape index: {}]
  %s2 = inlined_call_operand.vmem [shape: bf16[96,128], index: 2, kind: input, shape index: {}]
  %s3 = inlined_call_operand.vmem [shape: f32[1,128], index: 3, kind: input, shape index: {}]
  %s4 = inlined_call_operand.vmem [shape: bf16[128,128], index: 4, kind: input, shape index: {}]
  %s5 = inlined_call_operand.vmem [shape: f32[1,128], index: 5, kind: input, shape index: {}]
  %s6 = inlined_call_operand.hbm [shape: f32[2,1,128], index: 6, kind: output, shape index: {}]
  %s7 = sld [smem:[#allocation0]]
  $region133: #{tpu_custom_call.1} parent=0
    _
  %s9 = ssub.s32 1, %s7
  %s10 = scalar_select 0, %s9, %s7
  $region1: #{tpu_custom_call.1} parent=0
    #allocation2 [shape = 'u8[81920]{0}', space=vmem, size = 0x14000, scoped, tag = 'input window, operand 0']
    #allocation3 [shape = 'u8[245760]{0}', space=vmem, size = 0x3c000, scoped, tag = 'input window, operand 1']
    #allocation4 [shape = 'u8[1024]{0}', space=vmem, size = 0x400, scoped, tag = 'output window, operand 0']
    #allocation5 [shape = 's32[2]{0}', space=sflag, size = 0x8, scoped, tag = 'scoped memory for tpu_custom_call.1']
    %11 = vsyncpa [#allocation5], 0
    %s12 = scalar_lea.sflag [#allocation5], 1
    %13 = vsyncpa %s12, 0
    loop: start=0, step=1, limit=4
    $region2: #{tpu_custom_call.1} parent=1 // loop_pre_header
      _
    $region3: #{tpu_custom_call.1} parent=1 // loop_header
      %s15 = sphi 0, %s19
      %p16 = scmp.ge.s32.totalorder %s15, 4
      %s25 = sphi 0, %s27
      %s28 = sphi 0, %s25
      %s29 = sphi 0, %s28
      %s45 = sphi 0, %s29
      %s51 = sphi 0, %s53
      %s54 = sphi 0, %s51
      %s55 = sphi 0, %s54
      %s71 = sphi 0, %s55
      %s75 = sphi 0, %s75
      %s77 = sphi 0, %s75
      %s78 = sphi 0, %s77
      %s92 = sphi 0, %s78
      %s96 = sphi 0, %s96
      %s98 = sphi 0, %s96
      %s99 = sphi 0, %s98
      %s113 = sphi 0, %s99
      %s117 = sphi 0, %s117
      %s119 = sphi 0, %s117
      %s120 = sphi 0, %s119
      %s134 = sphi 0, %s120
      %s138 = sphi 0, %s138
      %s140 = sphi 0, %s138
      %s141 = sphi 0, %s140
      %s155 = sphi 0, %s141
      %s161 = sphi 0, %s163
      %s164 = sphi 0, %s161
      %s165 = sphi 0, %s164
      %s181 = sphi 0, %s165
    $region4: #{tpu_custom_call.1} parent=1 // loop_header_branch
      %18 = sbr.rel (%p16) target = $region8
    $region5: #{tpu_custom_call.1} parent=1 // loop_body
      %s20 = ssub.s32 %s15, 1
      %s21 = ssub.s32 %s15, 2
      %s22 = sadd.s32 %s15, 1
      %s23 = ssub.s32 %s15, %s22
      %p24 = scmp.eq.s32.totalorder %s23, 0
      %s26 = sadd.s32 %s25, 1
      %s27 = scalar_select %p24, %s25, %s26
      %p30 = pneg %p24
      %p31 = scmp.eq.s32.totalorder %s15, 1
      %p32 = por %p30, %p31
      %p33 = scmp.ne.s32.totalorder %s25, %s28
      %p34 = scmp.eq.s32.totalorder %s15, 0
      %p35 = por %p33, %p34
      %p36 = scmp.ne.s32.totalorder %s25, %s28
      %p37 = scmp.eq.s32.totalorder %s20, 1
      %p38 = por %p36, %p37
      %p39 = scmp.ne.s32.totalorder %s28, %s29
      %p40 = scmp.eq.s32.totalorder %s20, 0
      %p41 = por %p39, %p40
      %p42 = scmp.ne.s32.totalorder %s28, %s29
      %p43 = scmp.eq.s32.totalorder %s21, 1
      %p44 = por %p42, %p43
      %p46 = scmp.ne.s32.totalorder %s29, %s45
      %p47 = scmp.eq.s32.totalorder %s21, 0
      %p48 = por %p46, %p47
      %s49 = ssub.s32 %s15, %s22
      %p50 = scmp.eq.s32.totalorder %s49, 0
      %s52 = sadd.s32 %s51, 1
      %s53 = scalar_select %p50, %s51, %s52
      %p56 = pneg %p50
      %p57 = scmp.eq.s32.totalorder %s15, 1
      %p58 = por %p56, %p57
      %p59 = scmp.ne.s32.totalorder %s51, %s54
      %p60 = scmp.eq.s32.totalorder %s15, 0
      %p61 = por %p59, %p60
      %p62 = scmp.ne.s32.totalorder %s51, %s54
      %p63 = scmp.eq.s32.totalorder %s20, 1
      %p64 = por %p62, %p63
      %p65 = scmp.ne.s32.totalorder %s54, %s55
      %p66 = scmp.eq.s32.totalorder %s20, 0
      %p67 = por %p65, %p66
      %p68 = scmp.ne.s32.totalorder %s54, %s55
      %p69 = scmp.eq.s32.totalorder %s21, 1
      %p70 = por %p68, %p69
      %p72 = scmp.ne.s32.totalorder %s55, %s71
      %p73 = scmp.eq.s32.totalorder %s21, 0
      %p74 = por %p72, %p73
      %s76 = sadd.s32 %s75, 1
      %p79 = scmp.eq.s32.totalorder %s15, 1
      %p80 = scmp.ne.s32.totalorder %s75, %s77
      %p81 = scmp.eq.s32.totalorder %s15, 0
      %p82 = por %p80, %p81
      %p83 = scmp.ne.s32.totalorder %s75, %s77
      %p84 = scmp.eq.s32.totalorder %s20, 1
      %p85 = por %p83, %p84
      %p86 = scmp.ne.s32.totalorder %s77, %s78
      %p87 = scmp.eq.s32.totalorder %s20, 0
      %p88 = por %p86, %p87
      %p89 = scmp.ne.s32.totalorder %s77, %s78
      %p90 = scmp.eq.s32.totalorder %s21, 1
      %p91 = por %p89, %p90
      %p93 = scmp.ne.s32.totalorder %s78, %s92
      %p94 = scmp.eq.s32.totalorder %s21, 0
      %p95 = por %p93, %p94
      %s97 = sadd.s32 %s96, 1
      %p100 = scmp.eq.s32.totalorder %s15, 1
      %p101 = scmp.ne.s32.totalorder %s96, %s98
      %p102 = scmp.eq.s32.totalorder %s15, 0
      %p103 = por %p101, %p102
      %p104 = scmp.ne.s32.totalorder %s96, %s98
      %p105 = scmp.eq.s32.totalorder %s20, 1
      %p106 = por %p104, %p105
      %p107 = scmp.ne.s32.totalorder %s98, %s99
      %p108 = scmp.eq.s32.totalorder %s20, 0
      %p109 = por %p107, %p108
      %p110 = scmp.ne.s32.totalorder %s98, %s99
      %p111 = scmp.eq.s32.totalorder %s21, 1
      %p112 = por %p110, %p111
      %p114 = scmp.ne.s32.totalorder %s99, %s113
      %p115 = scmp.eq.s32.totalorder %s21, 0
      %p116 = por %p114, %p115
      %s118 = sadd.s32 %s117, 1
      %p121 = scmp.eq.s32.totalorder %s15, 1
      %p122 = scmp.ne.s32.totalorder %s117, %s119
      %p123 = scmp.eq.s32.totalorder %s15, 0
      %p124 = por %p122, %p123
      %p125 = scmp.ne.s32.totalorder %s117, %s119
      %p126 = scmp.eq.s32.totalorder %s20, 1
      %p127 = por %p125, %p126
      %p128 = scmp.ne.s32.totalorder %s119, %s120
      %p129 = scmp.eq.s32.totalorder %s20, 0
      %p130 = por %p128, %p129
      %p131 = scmp.ne.s32.totalorder %s119, %s120
      %p132 = scmp.eq.s32.totalorder %s21, 1
      %p133 = por %p131, %p132
      %p135 = scmp.ne.s32.totalorder %s120, %s134
      %p136 = scmp.eq.s32.totalorder %s21, 0
      %p137 = por %p135, %p136
      %s139 = sadd.s32 %s138, 1
      %p142 = scmp.eq.s32.totalorder %s15, 1
      %p143 = scmp.ne.s32.totalorder %s138, %s140
      %p144 = scmp.eq.s32.totalorder %s15, 0
      %p145 = por %p143, %p144
      %p146 = scmp.ne.s32.totalorder %s138, %s140
      %p147 = scmp.eq.s32.totalorder %s20, 1
      %p148 = por %p146, %p147
      %p149 = scmp.ne.s32.totalorder %s140, %s141
      %p150 = scmp.eq.s32.totalorder %s20, 0
      %p151 = por %p149, %p150
      %p152 = scmp.ne.s32.totalorder %s140, %s141
      %p153 = scmp.eq.s32.totalorder %s21, 1
      %p154 = por %p152, %p153
      %p156 = scmp.ne.s32.totalorder %s141, %s155
      %p157 = scmp.eq.s32.totalorder %s21, 0
      %p158 = por %p156, %p157
      %s159 = ssub.s32 %s15, %s22
      %p160 = scmp.eq.s32.totalorder %s159, 0
      %s162 = sadd.s32 %s161, 1
      %s163 = scalar_select %p160, %s161, %s162
      %p166 = pneg %p160
      %p167 = scmp.eq.s32.totalorder %s15, 1
      %p168 = por %p166, %p167
      %p169 = scmp.ne.s32.totalorder %s161, %s164
      %p170 = scmp.eq.s32.totalorder %s15, 0
      %p171 = por %p169, %p170
      %p172 = scmp.ne.s32.totalorder %s161, %s164
      %p173 = scmp.eq.s32.totalorder %s20, 1
      %p174 = por %p172, %p173
      %p175 = scmp.ne.s32.totalorder %s164, %s165
      %p176 = scmp.eq.s32.totalorder %s20, 0
      %p177 = por %p175, %p176
      %p178 = scmp.ne.s32.totalorder %s164, %s165
      %p179 = scmp.eq.s32.totalorder %s21, 1
      %p180 = por %p178, %p179
      %p182 = scmp.ne.s32.totalorder %s165, %s181
      %p183 = scmp.eq.s32.totalorder %s21, 0
      %p184 = por %p182, %p183
      %p185 = scmp.le.s32.totalorder 1, %s15
      %p186 = scmp.lt.s32.totalorder %s15, 3
      %p187 = pnand %p185, %p186
      %p188 = pneg %p187
      // Predicated region
      $region9: #{tpu_custom_call.1} parent=5 // pred_check
        _
      $region10: #{tpu_custom_call.1} parent=5 // pred_check_branch
        %190 = sbr.rel (%p187) target = $region12
      $region11: #{tpu_custom_call.1} parent=5 // pred_region
        %s191 = ssub.s32 %s15, 1
        // Predicated region
        $region13: #{tpu_custom_call.1} parent=11 // pred_check
          %p192 = pneg %p88
        $region14: #{tpu_custom_call.1} parent=11 // pred_check_branch
          %194 = sbr.rel (%p192) target = $region16
        $region15: #{tpu_custom_call.1} parent=11 // pred_region
          _
        $region16: #{tpu_custom_call.1} parent=11 // pred_fallthru
          _
        // Predicated region
        $region17: #{tpu_custom_call.1} parent=11 // pred_check
          %p195 = pneg %p109
        $region18: #{tpu_custom_call.1} parent=11 // pred_check_branch
          %197 = sbr.rel (%p195) target = $region20
        $region19: #{tpu_custom_call.1} parent=11 // pred_region
          _
        $region20: #{tpu_custom_call.1} parent=11 // pred_fallthru
          _
        // Predicated region
        $region21: #{tpu_custom_call.1} parent=11 // pred_check
          %p198 = pneg %p130
        $region22: #{tpu_custom_call.1} parent=11 // pred_check_branch
          %200 = sbr.rel (%p198) target = $region24
        $region23: #{tpu_custom_call.1} parent=11 // pred_region
          _
        $region24: #{tpu_custom_call.1} parent=11 // pred_fallthru
          _
        // Predicated region
        $region25: #{tpu_custom_call.1} parent=11 // pred_check
          %p201 = pneg %p151
        $region26: #{tpu_custom_call.1} parent=11 // pred_check_branch
          %203 = sbr.rel (%p201) target = $region28
        $region27: #{tpu_custom_call.1} parent=11 // pred_region
          _
        $region28: #{tpu_custom_call.1} parent=11 // pred_fallthru
          _
      $region12: #{tpu_custom_call.1} parent=5 // pred_fallthru
        _
      %p204 = scmp.lt.s32.totalorder %s15, 2
      // Predicated region
      $region29: #{tpu_custom_call.1} parent=5 // pred_check
        %p205 = pneg %p204
      $region30: #{tpu_custom_call.1} parent=5 // pred_check_branch
        %207 = sbr.rel (%p205) target = $region32
      $region31: #{tpu_custom_call.1} parent=5 // pred_region
        // Predicated region
        $region33: #{tpu_custom_call.1} parent=31 // pred_check
          %p208 = pneg %p35
        $region34: #{tpu_custom_call.1} parent=31 // pred_check_branch
          %210 = sbr.rel (%p208) target = $region36
        $region35: #{tpu_custom_call.1} parent=31 // pred_region
          %s211 = sand.u32 %s25, 1
          %s212 = sand.u32 %s25, 1
          %s213 = smul.addr %s212, 80
          %s214 = scalar_lea.vmem [#allocation2], %s213
          %s215 = smul.u32 2, %s15
          %s216 = smul.addr %s215, 8
          %s217 = scalar_lea.vmem %s0, %s216
          // Predicated region
          $region37: #{tpu_custom_call.1} parent=35 // pred_check
            _
          $region38: #{tpu_custom_call.1} parent=35 // pred_check_branch
            %219 = sbr.rel (0) target = $region40
          $region39: #{tpu_custom_call.1} parent=35 // pred_region
            // Predicated region
            $region41: #{tpu_custom_call.1} parent=39 // pred_check
              _
            $region42: #{tpu_custom_call.1} parent=39 // pred_check_branch
              %221 = sbr.rel (0) target = $region44
            $region43: #{tpu_custom_call.1} parent=39 // pred_region
              // Predicated region
              $region56: #{tpu_custom_call.1} parent=43 // pred_check
                _
              $region57: #{tpu_custom_call.1} parent=43 // pred_check_branch
                %255 = sbr.rel (0) target = $region59
              $region58: #{tpu_custom_call.1} parent=43 // pred_region
                loop: start=0, step=1, limit=1
                $region60: #{tpu_custom_call.1} parent=58 // loop_pre_header
                  _
                $region61: #{tpu_custom_call.1} parent=58 // loop_header
                  %s257 = sphi 0, %s261
                  %p258 = scmp.ge.s32.totalorder %s257, 1
                  %s262 = sphi %s217, %s217
                  %s263 = sphi %s214, %s214
                $region62: #{tpu_custom_call.1} parent=58 // loop_header_branch
                  %260 = sbr.rel (%p258) target = $region66
                $region63: #{tpu_custom_call.1} parent=58 // loop_body
                  %v264 = vld [vmem:[%s262] sm:$0xff]
                  %265 = vst [vmem:[%s263] sm:$0xff] %v264
                  %v266 = vld [vmem:[%s262 + $0x8] sm:$0xff]
                  %267 = vst [vmem:[%s263 + $0x8] sm:$0xff] %v266
                  %v268 = vld [vmem:[%s262 + $0x20] sm:$0xff]
                  %269 = vst [vmem:[%s263 + $0x10] sm:$0xff] %v268
                  %v270 = vld [vmem:[%s262 + $0x28] sm:$0xff]
                  %271 = vst [vmem:[%s263 + $0x18] sm:$0xff] %v270
                  %v272 = vld [vmem:[%s262 + $0x40] sm:$0xff]
                  %273 = vst [vmem:[%s263 + $0x20] sm:$0xff] %v272
                  %v274 = vld [vmem:[%s262 + $0x48] sm:$0xff]
                  %275 = vst [vmem:[%s263 + $0x28] sm:$0xff] %v274
                  %v276 = vld [vmem:[%s262 + $0x60] sm:$0xff]
                  %277 = vst [vmem:[%s263 + $0x30] sm:$0xff] %v276
                  %v278 = vld [vmem:[%s262 + $0x68] sm:$0xff]
                  %279 = vst [vmem:[%s263 + $0x38] sm:$0xff] %v278
                  %v280 = vld [vmem:[%s262 + $0x80] sm:$0xff]
                  %281 = vst [vmem:[%s263 + $0x40] sm:$0xff] %v280
                  %v282 = vld [vmem:[%s262 + $0x88] sm:$0xff]
                  %283 = vst [vmem:[%s263 + $0x48] sm:$0xff] %v282
                $region64: #{tpu_custom_call.1} parent=58 // loop_footer
                  %s261 = sadd.s32 1, %s257
                $region65: #{tpu_custom_call.1} parent=58 // loop_footer_branch
                  %256 = sbr.rel target = $region61
                $region66: #{tpu_custom_call.1} parent=58 // loop_exit
                  _
              $region59: #{tpu_custom_call.1} parent=43 // pred_fallthru
                _
              // Predicated region
              $region67: #{tpu_custom_call.1} parent=43 // pred_check
                _
              $region68: #{tpu_custom_call.1} parent=43 // pred_check_branch
                %285 = sbr.rel target = $region70
              $region69: #{tpu_custom_call.1} parent=43 // pred_region
                _
              $region70: #{tpu_custom_call.1} parent=43 // pred_fallthru
                _
            $region44: #{tpu_custom_call.1} parent=39 // pred_fallthru
              _
            // Predicated region
            $region45: #{tpu_custom_call.1} parent=39 // pred_check
              _
            $region46: #{tpu_custom_call.1} parent=39 // pred_check_branch
              %223 = sbr.rel target = $region48
            $region47: #{tpu_custom_call.1} parent=39 // pred_region
              %s225 = ssub.s32 256, 1
              loop: start=0, step=1, limit=1
              $region49: #{tpu_custom_call.1} parent=47 // loop_pre_header
                _
              $region50: #{tpu_custom_call.1} parent=47 // loop_header
                %s227 = sphi 0, %s231
                %p228 = scmp.ge.s32.totalorder %s227, 1
                %s232 = sphi %s217, %s217
                %s233 = sphi %s214, %s214
              $region51: #{tpu_custom_call.1} parent=47 // loop_header_branch
                %230 = sbr.rel (%p228) target = $region55
              $region52: #{tpu_custom_call.1} parent=47 // loop_body
                %v234 = vld [vmem:[%s232] sm:%s225]
                %235 = vst [vmem:[%s233] sm:%s225] %v234
                %v236 = vld [vmem:[%s232 + $0x8] sm:%s225]
                %237 = vst [vmem:[%s233 + $0x8] sm:%s225] %v236
                %v238 = vld [vmem:[%s232 + $0x20] sm:%s225]
                %239 = vst [vmem:[%s233 + $0x10] sm:%s225] %v238
                %v240 = vld [vmem:[%s232 + $0x28] sm:%s225]
                %241 = vst [vmem:[%s233 + $0x18] sm:%s225] %v240
                %v242 = vld [vmem:[%s232 + $0x40] sm:%s225]
                %243 = vst [vmem:[%s233 + $0x20] sm:%s225] %v242
                %v244 = vld [vmem:[%s232 + $0x48] sm:%s225]
                %245 = vst [vmem:[%s233 + $0x28] sm:%s225] %v244
                %v246 = vld [vmem:[%s232 + $0x60] sm:%s225]
                %247 = vst [vmem:[%s233 + $0x30] sm:%s225] %v246
                %v248 = vld [vmem:[%s232 + $0x68] sm:%s225]
                %249 = vst [vmem:[%s233 + $0x38] sm:%s225] %v248
                %v250 = vld [vmem:[%s232 + $0x80] sm:%s225]
                %251 = vst [vmem:[%s233 + $0x40] sm:%s225] %v250
                %v252 = vld [vmem:[%s232 + $0x88] sm:%s225]
                %253 = vst [vmem:[%s233 + $0x48] sm:%s225] %v252
              $region53: #{tpu_custom_call.1} parent=47 // loop_footer
                %s231 = sadd.s32 1, %s227
              $region54: #{tpu_custom_call.1} parent=47 // loop_footer_branch
                %226 = sbr.rel target = $region50
              $region55: #{tpu_custom_call.1} parent=47 // loop_exit
                _
            $region48: #{tpu_custom_call.1} parent=39 // pred_fallthru
              _
          $region40: #{tpu_custom_call.1} parent=35 // pred_fallthru
            _
          %286 = vnop
        $region36: #{tpu_custom_call.1} parent=31 // pred_fallthru
          _
        // Predicated region
        $region71: #{tpu_custom_call.1} parent=31 // pred_check
          %p287 = pneg %p61
        $region72: #{tpu_custom_call.1} parent=31 // pred_check_branch
          %289 = sbr.rel (%p287) target = $region74
        $region73: #{tpu_custom_call.1} parent=31 // pred_region
          %s290 = sand.u32 %s51, 1
          %s291 = sand.u32 %s51, 1
          %s292 = smul.addr %s291, 240
          %s293 = scalar_lea.vmem [#allocation3], %s292
          %s294 = smul.u32 2, %s15
          %s295 = smul.addr %s294, 8
          %s296 = scalar_lea.vmem %s1, %s295
          // Predicated region
          $region75: #{tpu_custom_call.1} parent=73 // pred_check
            _
          $region76: #{tpu_custom_call.1} parent=73 // pred_check_branch
            %298 = sbr.rel (0) target = $region78
          $region77: #{tpu_custom_call.1} parent=73 // pred_region
            // Predicated region
            $region79: #{tpu_custom_call.1} parent=77 // pred_check
              _
            $region80: #{tpu_custom_call.1} parent=77 // pred_check_branch
              %300 = sbr.rel (0) target = $region82
            $region81: #{tpu_custom_call.1} parent=77 // pred_region
              // Predicated region
              $region94: #{tpu_custom_call.1} parent=81 // pred_check
                _
              $region95: #{tpu_custom_call.1} parent=81 // pred_check_branch
                %374 = sbr.rel (0) target = $region97
              $region96: #{tpu_custom_call.1} parent=81 // pred_region
                loop: start=0, step=1, limit=1
                $region98: #{tpu_custom_call.1} parent=96 // loop_pre_header
                  _
                $region99: #{tpu_custom_call.1} parent=96 // loop_header
                  %s376 = sphi 0, %s380
                  %p377 = scmp.ge.s32.totalorder %s376, 1
                  %s381 = sphi %s296, %s296
                  %s382 = sphi %s293, %s293
                $region100: #{tpu_custom_call.1} parent=96 // loop_header_branch
                  %379 = sbr.rel (%p377) target = $region104
                $region101: #{tpu_custom_call.1} parent=96 // loop_body
                  %v383 = vld [vmem:[%s381] sm:$0xff]
                  %384 = vst [vmem:[%s382] sm:$0xff] %v383
                  %v385 = vld [vmem:[%s381 + $0x8] sm:$0xff]
                  %386 = vst [vmem:[%s382 + $0x8] sm:$0xff] %v385
                  %v387 = vld [vmem:[%s381 + $0x20] sm:$0xff]
                  %388 = vst [vmem:[%s382 + $0x10] sm:$0xff] %v387
                  %v389 = vld [vmem:[%s381 + $0x28] sm:$0xff]
                  %390 = vst [vmem:[%s382 + $0x18] sm:$0xff] %v389
                  %v391 = vld [vmem:[%s381 + $0x40] sm:$0xff]
                  %392 = vst [vmem:[%s382 + $0x20] sm:$0xff] %v391
                  %v393 = vld [vmem:[%s381 + $0x48] sm:$0xff]
                  %394 = vst [vmem:[%s382 + $0x28] sm:$0xff] %v393
                  %v395 = vld [vmem:[%s381 + $0x60] sm:$0xff]
                  %396 = vst [vmem:[%s382 + $0x30] sm:$0xff] %v395
                  %v397 = vld [vmem:[%s381 + $0x68] sm:$0xff]
                  %398 = vst [vmem:[%s382 + $0x38] sm:$0xff] %v397
                  %v399 = vld [vmem:[%s381 + $0x80] sm:$0xff]
                  %400 = vst [vmem:[%s382 + $0x40] sm:$0xff] %v399
                  %v401 = vld [vmem:[%s381 + $0x88] sm:$0xff]
                  %402 = vst [vmem:[%s382 + $0x48] sm:$0xff] %v401
                  %v403 = vld [vmem:[%s381 + $0xa0] sm:$0xff]
                  %404 = vst [vmem:[%s382 + $0x50] sm:$0xff] %v403
                  %v405 = vld [vmem:[%s381 + $0xa8] sm:$0xff]
                  %406 = vst [vmem:[%s382 + $0x58] sm:$0xff] %v405
                  %v407 = vld [vmem:[%s381 + $0xc0] sm:$0xff]
                  %408 = vst [vmem:[%s382 + $0x60] sm:$0xff] %v407
                  %v409 = vld [vmem:[%s381 + $0xc8] sm:$0xff]
                  %410 = vst [vmem:[%s382 + $0x68] sm:$0xff] %v409
                  %v411 = vld [vmem:[%s381 + $0xe0] sm:$0xff]
                  %412 = vst [vmem:[%s382 + $0x70] sm:$0xff] %v411
                  %v413 = vld [vmem:[%s381 + $0xe8] sm:$0xff]
                  %414 = vst [vmem:[%s382 + $0x78] sm:$0xff] %v413
                  %v415 = vld [vmem:[%s381 + $0x100] sm:$0xff]
                  %416 = vst [vmem:[%s382 + $0x80] sm:$0xff] %v415
                  %v417 = vld [vmem:[%s381 + $0x108] sm:$0xff]
                  %418 = vst [vmem:[%s382 + $0x88] sm:$0xff] %v417
                  %v419 = vld [vmem:[%s381 + $0x120] sm:$0xff]
                  %420 = vst [vmem:[%s382 + $0x90] sm:$0xff] %v419
                  %v421 = vld [vmem:[%s381 + $0x128] sm:$0xff]
                  %422 = vst [vmem:[%s382 + $0x98] sm:$0xff] %v421
                  %v423 = vld [vmem:[%s381 + $0x140] sm:$0xff]
                  %424 = vst [vmem:[%s382 + $0xa0] sm:$0xff] %v423
                  %v425 = vld [vmem:[%s381 + $0x148] sm:$0xff]
                  %426 = vst [vmem:[%s382 + $0xa8] sm:$0xff] %v425
                  %v427 = vld [vmem:[%s381 + $0x160] sm:$0xff]
                  %428 = vst [vmem:[%s382 + $0xb0] sm:$0xff] %v427
                  %v429 = vld [vmem:[%s381 + $0x168] sm:$0xff]
                  %430 = vst [vmem:[%s382 + $0xb8] sm:$0xff] %v429
                  %v431 = vld [vmem:[%s381 + $0x180] sm:$0xff]
                  %432 = vst [vmem:[%s382 + $0xc0] sm:$0xff] %v431
                  %v433 = vld [vmem:[%s381 + $0x188] sm:$0xff]
                  %434 = vst [vmem:[%s382 + $0xc8] sm:$0xff] %v433
                  %v435 = vld [vmem:[%s381 + $0x1a0] sm:$0xff]
                  %436 = vst [vmem:[%s382 + $0xd0] sm:$0xff] %v435
                  %v437 = vld [vmem:[%s381 + $0x1a8] sm:$0xff]
                  %438 = vst [vmem:[%s382 + $0xd8] sm:$0xff] %v437
                  %v439 = vld [vmem:[%s381 + $0x1c0] sm:$0xff]
                  %440 = vst [vmem:[%s382 + $0xe0] sm:$0xff] %v439
                  %v441 = vld [vmem:[%s381 + $0x1c8] sm:$0xff]
                  %442 = vst [vmem:[%s382 + $0xe8] sm:$0xff] %v441
                $region102: #{tpu_custom_call.1} parent=96 // loop_footer
                  %s380 = sadd.s32 1, %s376
                $region103: #{tpu_custom_call.1} parent=96 // loop_footer_branch
                  %375 = sbr.rel target = $region99
                $region104: #{tpu_custom_call.1} parent=96 // loop_exit
                  _
              $region97: #{tpu_custom_call.1} parent=81 // pred_fallthru
                _
              // Predicated region
              $region105: #{tpu_custom_call.1} parent=81 // pred_check
                _
              $region106: #{tpu_custom_call.1} parent=81 // pred_check_branch
                %444 = sbr.rel target = $region108
              $region107: #{tpu_custom_call.1} parent=81 // pred_region
                _
              $region108: #{tpu_custom_call.1} parent=81 // pred_fallthru
                _
            $region82: #{tpu_custom_call.1} parent=77 // pred_fallthru
              _
            // Predicated region
            $region83: #{tpu_custom_call.1} parent=77 // pred_check
              _
            $region84: #{tpu_custom_call.1} parent=77 // pred_check_branch
              %302 = sbr.rel target = $region86
            $region85: #{tpu_custom_call.1} parent=77 // pred_region
              %s304 = ssub.s32 256, 1
              loop: start=0, step=1, limit=1
              $region87: #{tpu_custom_call.1} parent=85 // loop_pre_header
                _
              $region88: #{tpu_custom_call.1} parent=85 // loop_header
                %s306 = sphi 0, %s310
                %p307 = scmp.ge.s32.totalorder %s306, 1
                %s311 = sphi %s296, %s296
                %s312 = sphi %s293, %s293
              $region89: #{tpu_custom_call.1} parent=85 // loop_header_branch
                %309 = sbr.rel (%p307) target = $region93
              $region90: #{tpu_custom_call.1} parent=85 // loop_body
                %v313 = vld [vmem:[%s311] sm:%s304]
                %314 = vst [vmem:[%s312] sm:%s304] %v313
                %v315 = vld [vmem:[%s311 + $0x8] sm:%s304]
                %316 = vst [vmem:[%s312 + $0x8] sm:%s304] %v315
                %v317 = vld [vmem:[%s311 + $0x20] sm:%s304]
                %318 = vst [vmem:[%s312 + $0x10] sm:%s304] %v317
                %v319 = vld [vmem:[%s311 + $0x28] sm:%s304]
                %320 = vst [vmem:[%s312 + $0x18] sm:%s304] %v319
                %v321 = vld [vmem:[%s311 + $0x40] sm:%s304]
                %322 = vst [vmem:[%s312 + $0x20] sm:%s304] %v321
                %v323 = vld [vmem:[%s311 + $0x48] sm:%s304]
                %324 = vst [vmem:[%s312 + $0x28] sm:%s304] %v323
                %v325 = vld [vmem:[%s311 + $0x60] sm:%s304]
                %326 = vst [vmem:[%s312 + $0x30] sm:%s304] %v325
                %v327 = vld [vmem:[%s311 + $0x68] sm:%s304]
                %328 = vst [vmem:[%s312 + $0x38] sm:%s304] %v327
                %v329 = vld [vmem:[%s311 + $0x80] sm:%s304]
                %330 = vst [vmem:[%s312 + $0x40] sm:%s304] %v329
                %v331 = vld [vmem:[%s311 + $0x88] sm:%s304]
                %332 = vst [vmem:[%s312 + $0x48] sm:%s304] %v331
                %v333 = vld [vmem:[%s311 + $0xa0] sm:%s304]
                %334 = vst [vmem:[%s312 + $0x50] sm:%s304] %v333
                %v335 = vld [vmem:[%s311 + $0xa8] sm:%s304]
                %336 = vst [vmem:[%s312 + $0x58] sm:%s304] %v335
                %v337 = vld [vmem:[%s311 + $0xc0] sm:%s304]
                %338 = vst [vmem:[%s312 + $0x60] sm:%s304] %v337
                %v339 = vld [vmem:[%s311 + $0xc8] sm:%s304]
                %340 = vst [vmem:[%s312 + $0x68] sm:%s304] %v339
                %v341 = vld [vmem:[%s311 + $0xe0] sm:%s304]
                %342 = vst [vmem:[%s312 + $0x70] sm:%s304] %v341
                %v343 = vld [vmem:[%s311 + $0xe8] sm:%s304]
                %344 = vst [vmem:[%s312 + $0x78] sm:%s304] %v343
                %v345 = vld [vmem:[%s311 + $0x100] sm:%s304]
                %346 = vst [vmem:[%s312 + $0x80] sm:%s304] %v345
                %v347 = vld [vmem:[%s311 + $0x108] sm:%s304]
                %348 = vst [vmem:[%s312 + $0x88] sm:%s304] %v347
                %v349 = vld [vmem:[%s311 + $0x120] sm:%s304]
                %350 = vst [vmem:[%s312 + $0x90] sm:%s304] %v349
                %v351 = vld [vmem:[%s311 + $0x128] sm:%s304]
                %352 = vst [vmem:[%s312 + $0x98] sm:%s304] %v351
                %v353 = vld [vmem:[%s311 + $0x140] sm:%s304]
                %354 = vst [vmem:[%s312 + $0xa0] sm:%s304] %v353
                %v355 = vld [vmem:[%s311 + $0x148] sm:%s304]
                %356 = vst [vmem:[%s312 + $0xa8] sm:%s304] %v355
                %v357 = vld [vmem:[%s311 + $0x160] sm:%s304]
                %358 = vst [vmem:[%s312 + $0xb0] sm:%s304] %v357
                %v359 = vld [vmem:[%s311 + $0x168] sm:%s304]
                %360 = vst [vmem:[%s312 + $0xb8] sm:%s304] %v359
                %v361 = vld [vmem:[%s311 + $0x180] sm:%s304]
                %362 = vst [vmem:[%s312 + $0xc0] sm:%s304] %v361
                %v363 = vld [vmem:[%s311 + $0x188] sm:%s304]
                %364 = vst [vmem:[%s312 + $0xc8] sm:%s304] %v363
                %v365 = vld [vmem:[%s311 + $0x1a0] sm:%s304]
                %366 = vst [vmem:[%s312 + $0xd0] sm:%s304] %v365
                %v367 = vld [vmem:[%s311 + $0x1a8] sm:%s304]
                %368 = vst [vmem:[%s312 + $0xd8] sm:%s304] %v367
                %v369 = vld [vmem:[%s311 + $0x1c0] sm:%s304]
                %370 = vst [vmem:[%s312 + $0xe0] sm:%s304] %v369
                %v371 = vld [vmem:[%s311 + $0x1c8] sm:%s304]
                %372 = vst [vmem:[%s312 + $0xe8] sm:%s304] %v371
              $region91: #{tpu_custom_call.1} parent=85 // loop_footer
                %s310 = sadd.s32 1, %s306
              $region92: #{tpu_custom_call.1} parent=85 // loop_footer_branch
                %305 = sbr.rel target = $region88
              $region93: #{tpu_custom_call.1} parent=85 // loop_exit
                _
            $region86: #{tpu_custom_call.1} parent=77 // pred_fallthru
              _
          $region78: #{tpu_custom_call.1} parent=73 // pred_fallthru
            _
          %445 = vnop
        $region74: #{tpu_custom_call.1} parent=31 // pred_fallthru
          _
      $region32: #{tpu_custom_call.1} parent=5 // pred_fallthru
        _
      %p446 = scmp.le.s32.totalorder 1, %s15
      %p447 = scmp.lt.s32.totalorder %s15, 3
      %p448 = pnand %p446, %p447
      %p449 = pneg %p448
      // Predicated region
      $region109: #{tpu_custom_call.1} parent=5 // pred_check
        _
      $region110: #{tpu_custom_call.1} parent=5 // pred_check_branch
        %451 = sbr.rel (%p448) target = $region112
      $region111: #{tpu_custom_call.1} parent=5 // pred_region
        %s452 = ssub.s32 %s15, 1
        %s453 = sand.u32 %s28, 1
        %s454 = sand.u32 %s28, 1
        %s455 = smul.addr %s454, 80
        %s456 = scalar_lea.vmem [#allocation2], %s455
        // Predicated region
        $region113: #{tpu_custom_call.1} parent=111 // pred_check
          %p457 = pneg %p41
        $region114: #{tpu_custom_call.1} parent=111 // pred_check_branch
          %459 = sbr.rel (%p457) target = $region116
        $region115: #{tpu_custom_call.1} parent=111 // pred_region
          _
        $region116: #{tpu_custom_call.1} parent=111 // pred_fallthru
          _
        %s460 = sand.u32 %s54, 1
        %s461 = sand.u32 %s54, 1
        %s462 = smul.addr %s461, 240
        %s463 = scalar_lea.vmem [#allocation3], %s462
        // Predicated region
        $region117: #{tpu_custom_call.1} parent=111 // pred_check
          %p464 = pneg %p67
        $region118: #{tpu_custom_call.1} parent=111 // pred_check_branch
          %466 = sbr.rel (%p464) target = $region120
        $region119: #{tpu_custom_call.1} parent=111 // pred_region
          _
        $region120: #{tpu_custom_call.1} parent=111 // pred_fallthru
          _
        %s467 = sand.u32 %s28, 1
        %s468 = sand.u32 %s28, 1
        %s469 = smul.addr %s468, 80
        %s470 = scalar_lea.vmem [#allocation2], %s469
        %p471 = pneg %p41
        %p472 = pneg %p38
        %s473 = sand.u32 %s54, 1
        %s474 = sand.u32 %s54, 1
        %s475 = smul.addr %s474, 240
        %s476 = scalar_lea.vmem [#allocation3], %s475
        %p477 = pneg %p67
        %p478 = pneg %p64
        %p479 = pneg %p88
        %p480 = pneg %p85
        %p481 = pneg %p109
        %p482 = pneg %p106
        %p483 = pneg %p130
        %p484 = pneg %p127
        %p485 = pneg %p151
        %p486 = pneg %p148
        %p487 = pneg %p177
        %p488 = pneg %p174
        %s489 = sand.u32 %s164, 1
        %s490 = scalar_lea.sflag [#allocation5], %s489
        %s491 = sand.u32 %s164, 1
        %s492 = scalar_lea.vmem [#allocation4], %s491
        %s493 = smul.u32 2, %s20
        %s494 = smul.u32 2, %s20
        %v496 = vld [vmem:[%s456] sm:$0xff]
        %v497 = vld [vmem:[%s456 + $0x8] sm:$0xff]
        %v498 = vld [vmem:[%s463] sm:$0xff]
        %v499 = vld [vmem:[%s463 + $0x8] sm:$0xff]
        %501 = vset.pattern.permute.xlu0 0
        %502 = vperm.xlu0 %501, %v498
        %v503 = vpop.permute.xlu0 %502
        %506 = vset.pattern.permute.xlu0 0
        %507 = vperm.xlu0 %506, %v499
        %v508 = vpop.permute.xlu0 %507
        %v510 = vmul.f32 %v496, %v503
        %v511 = vmul.f32 %v497, %v508
        %s512 = scalar_lea.vmem %s456, 16 [#allocation2]
        %v513 = vld [vmem:[%s512] sm:$0xff]
        %v514 = vld [vmem:[%s512 + $0x8] sm:$0xff]
        %s515 = scalar_lea.vmem %s463, 16 [#allocation3]
        %v516 = vld [vmem:[%s515] sm:$0xff]
        %v517 = vld [vmem:[%s515 + $0x8] sm:$0xff]
        %519 = vset.pattern.permute.xlu0 0
        %520 = vperm.xlu0 %519, %v516
        %v521 = vpop.permute.xlu0 %520
        %524 = vset.pattern.permute.xlu0 0
        %525 = vperm.xlu0 %524, %v517
        %v526 = vpop.permute.xlu0 %525
        %v528 = vmul.f32 %v513, %v521
        %v529 = vmul.f32 %v514, %v526
        %v530 = vadd.f32 %v510, %v528
        %v531 = vadd.f32 %v511, %v529
        %s532 = scalar_lea.vmem %s456, 32 [#allocation2]
        %v533 = vld [vmem:[%s532] sm:$0xff]
        %v534 = vld [vmem:[%s532 + $0x8] sm:$0xff]
        %s535 = scalar_lea.vmem %s463, 32 [#allocation3]
        %v536 = vld [vmem:[%s535] sm:$0xff]
        %v537 = vld [vmem:[%s535 + $0x8] sm:$0xff]
        %539 = vset.pattern.permute.xlu0 0
        %540 = vperm.xlu0 %539, %v536
        %v541 = vpop.permute.xlu0 %540
        %544 = vset.pattern.permute.xlu0 0
        %545 = vperm.xlu0 %544, %v537
        %v546 = vpop.permute.xlu0 %545
        %v548 = vmul.f32 %v533, %v541
        %v549 = vmul.f32 %v534, %v546
        %v550 = vadd.f32 %v530, %v548
        %v551 = vadd.f32 %v531, %v549
        %s552 = scalar_lea.vmem %s456, 48 [#allocation2]
        %v553 = vld [vmem:[%s552] sm:$0xff]
        %v554 = vld [vmem:[%s552 + $0x8] sm:$0xff]
        %s555 = scalar_lea.vmem %s463, 48 [#allocation3]
        %v556 = vld [vmem:[%s555] sm:$0xff]
        %v557 = vld [vmem:[%s555 + $0x8] sm:$0xff]
        %559 = vset.pattern.permute.xlu0 0
        %560 = vperm.xlu0 %559, %v556
        %v561 = vpop.permute.xlu0 %560
        %564 = vset.pattern.permute.xlu0 0
        %565 = vperm.xlu0 %564, %v557
        %v566 = vpop.permute.xlu0 %565
        %v568 = vmul.f32 %v553, %v561
        %v569 = vmul.f32 %v554, %v566
        %v570 = vadd.f32 %v550, %v568
        %v571 = vadd.f32 %v551, %v569
        %s572 = scalar_lea.vmem %s456, 64 [#allocation2]
        %v573 = vld [vmem:[%s572] sm:$0xff]
        %v574 = vld [vmem:[%s572 + $0x8] sm:$0xff]
        %s575 = scalar_lea.vmem %s463, 64 [#allocation3]
        %v576 = vld [vmem:[%s575] sm:$0xff]
        %v577 = vld [vmem:[%s575 + $0x8] sm:$0xff]
        %579 = vset.pattern.permute.xlu0 0
        %580 = vperm.xlu0 %579, %v576
        %v581 = vpop.permute.xlu0 %580
        %584 = vset.pattern.permute.xlu0 0
        %585 = vperm.xlu0 %584, %v577
        %v586 = vpop.permute.xlu0 %585
        %v588 = vmul.f32 %v573, %v581
        %v589 = vmul.f32 %v574, %v586
        %v590 = vadd.f32 %v570, %v588
        %v591 = vadd.f32 %v571, %v589
        %s592 = scalar_lea.vmem %s463, 80 [#allocation3]
        %v593 = vld [vmem:[%s592] sm:$0xff]
        %v594 = vld [vmem:[%s592 + $0x8] sm:$0xff]
        %596 = vset.pattern.permute.xlu0 0
        %597 = vperm.xlu0 %596, %v593
        %v598 = vpop.permute.xlu0 %597
        %601 = vset.pattern.permute.xlu0 0
        %602 = vperm.xlu0 %601, %v594
        %v603 = vpop.permute.xlu0 %602
        %v605 = vmul.f32 %v496, %v598
        %v606 = vmul.f32 %v497, %v603
        %s607 = scalar_lea.vmem %s463, 96 [#allocation3]
        %v608 = vld [vmem:[%s607] sm:$0xff]
        %v609 = vld [vmem:[%s607 + $0x8] sm:$0xff]
        %611 = vset.pattern.permute.xlu0 0
        %612 = vperm.xlu0 %611, %v608
        %v613 = vpop.permute.xlu0 %612
        %616 = vset.pattern.permute.xlu0 0
        %617 = vperm.xlu0 %616, %v609
        %v618 = vpop.permute.xlu0 %617
        %v620 = vmul.f32 %v513, %v613
        %v621 = vmul.f32 %v514, %v618
        %v622 = vadd.f32 %v605, %v620
        %v623 = vadd.f32 %v606, %v621
        %s624 = scalar_lea.vmem %s463, 112 [#allocation3]
        %v625 = vld [vmem:[%s624] sm:$0xff]
        %v626 = vld [vmem:[%s624 + $0x8] sm:$0xff]
        %628 = vset.pattern.permute.xlu0 0
        %629 = vperm.xlu0 %628, %v625
        %v630 = vpop.permute.xlu0 %629
        %633 = vset.pattern.permute.xlu0 0
        %634 = vperm.xlu0 %633, %v626
        %v635 = vpop.permute.xlu0 %634
        %v637 = vmul.f32 %v533, %v630
        %v638 = vmul.f32 %v534, %v635
        %v639 = vadd.f32 %v622, %v637
        %v640 = vadd.f32 %v623, %v638
        %s641 = scalar_lea.vmem %s463, 128 [#allocation3]
        %v642 = vld [vmem:[%s641] sm:$0xff]
        %v643 = vld [vmem:[%s641 + $0x8] sm:$0xff]
        %645 = vset.pattern.permute.xlu0 0
        %646 = vperm.xlu0 %645, %v642
        %v647 = vpop.permute.xlu0 %646
        %650 = vset.pattern.permute.xlu0 0
        %651 = vperm.xlu0 %650, %v643
        %v652 = vpop.permute.xlu0 %651
        %v654 = vmul.f32 %v553, %v647
        %v655 = vmul.f32 %v554, %v652
        %v656 = vadd.f32 %v639, %v654
        %v657 = vadd.f32 %v640, %v655
        %s658 = scalar_lea.vmem %s463, 144 [#allocation3]
        %v659 = vld [vmem:[%s658] sm:$0xff]
        %v660 = vld [vmem:[%s658 + $0x8] sm:$0xff]
        %662 = vset.pattern.permute.xlu0 0
        %663 = vperm.xlu0 %662, %v659
        %v664 = vpop.permute.xlu0 %663
        %667 = vset.pattern.permute.xlu0 0
        %668 = vperm.xlu0 %667, %v660
        %v669 = vpop.permute.xlu0 %668
        %v671 = vmul.f32 %v573, %v664
        %v672 = vmul.f32 %v574, %v669
        %v673 = vadd.f32 %v656, %v671
        %v674 = vadd.f32 %v657, %v672
        %s675 = scalar_lea.vmem %s463, 160 [#allocation3]
        %v676 = vld [vmem:[%s675] sm:$0xff]
        %v677 = vld [vmem:[%s675 + $0x8] sm:$0xff]
        %679 = vset.pattern.permute.xlu0 0
        %680 = vperm.xlu0 %679, %v676
        %v681 = vpop.permute.xlu0 %680
        %684 = vset.pattern.permute.xlu0 0
        %685 = vperm.xlu0 %684, %v677
        %v686 = vpop.permute.xlu0 %685
        %v688 = vmul.f32 %v496, %v681
        %v689 = vmul.f32 %v497, %v686
        %s690 = scalar_lea.vmem %s463, 176 [#allocation3]
        %v691 = vld [vmem:[%s690] sm:$0xff]
        %v692 = vld [vmem:[%s690 + $0x8] sm:$0xff]
        %694 = vset.pattern.permute.xlu0 0
        %695 = vperm.xlu0 %694, %v691
        %v696 = vpop.permute.xlu0 %695
        %699 = vset.pattern.permute.xlu0 0
        %700 = vperm.xlu0 %699, %v692
        %v701 = vpop.permute.xlu0 %700
        %v703 = vmul.f32 %v513, %v696
        %v704 = vmul.f32 %v514, %v701
        %v705 = vadd.f32 %v688, %v703
        %v706 = vadd.f32 %v689, %v704
        %s707 = scalar_lea.vmem %s463, 192 [#allocation3]
        %v708 = vld [vmem:[%s707] sm:$0xff]
        %v709 = vld [vmem:[%s707 + $0x8] sm:$0xff]
        %711 = vset.pattern.permute.xlu0 0
        %712 = vperm.xlu0 %711, %v708
        %v713 = vpop.permute.xlu0 %712
        %716 = vset.pattern.permute.xlu0 0
        %717 = vperm.xlu0 %716, %v709
        %v718 = vpop.permute.xlu0 %717
        %v720 = vmul.f32 %v533, %v713
        %v721 = vmul.f32 %v534, %v718
        %v722 = vadd.f32 %v705, %v720
        %v723 = vadd.f32 %v706, %v721
        %s724 = scalar_lea.vmem %s463, 208 [#allocation3]
        %v725 = vld [vmem:[%s724] sm:$0xff]
        %v726 = vld [vmem:[%s724 + $0x8] sm:$0xff]
        %728 = vset.pattern.permute.xlu0 0
        %729 = vperm.xlu0 %728, %v725
        %v730 = vpop.permute.xlu0 %729
        %733 = vset.pattern.permute.xlu0 0
        %734 = vperm.xlu0 %733, %v726
        %v735 = vpop.permute.xlu0 %734
        %v737 = vmul.f32 %v553, %v730
        %v738 = vmul.f32 %v554, %v735
        %v739 = vadd.f32 %v722, %v737
        %v740 = vadd.f32 %v723, %v738
        %s741 = scalar_lea.vmem %s463, 224 [#allocation3]
        %v742 = vld [vmem:[%s741] sm:$0xff]
        %v743 = vld [vmem:[%s741 + $0x8] sm:$0xff]
        %745 = vset.pattern.permute.xlu0 0
        %746 = vperm.xlu0 %745, %v742
        %v747 = vpop.permute.xlu0 %746
        %750 = vset.pattern.permute.xlu0 0
        %751 = vperm.xlu0 %750, %v743
        %v752 = vpop.permute.xlu0 %751
        %v754 = vmul.f32 %v573, %v747
        %v755 = vmul.f32 %v574, %v752
        %v756 = vadd.f32 %v739, %v754
        %v757 = vadd.f32 %v740, %v755
        %760 = vrot.lane.b32.xlu0 %v673, 32
        %v761 = vpop.permute.xlu0 %760
        %762 = vrot.lane.b32.xlu0 %v674, 32
        %v763 = vpop.permute.xlu0 %762
        %768 = vrot.lane.b32.xlu0 %v756, 64
        %v769 = vpop.permute.xlu0 %768
        %770 = vrot.lane.b32.xlu0 %v757, 64
        %v771 = vpop.permute.xlu0 %770
        %vm774 = vcmask 261120
        %v775 = vsel %vm774, %v590, %v761
        %v776 = vsel %vm774, %v591, %v763
        %vm777 = vcmask 523264
        %v778 = vsel %vm777, %v775, %v769
        %v779 = vsel %vm777, %v776, %v771
        %v780 = vpack.c.bf16 %v779, %v778
        %v781 = vld [vmem:[%s2] sm:$0xf]
        %v782 = vld [vmem:[%s2 + $0x4] sm:$0xf]
        %v783 = vld [vmem:[%s2 + $0x8] sm:$0xf]
        %v784 = vld [vmem:[%s2 + $0xc] sm:$0xf]
        %v785 = vld [vmem:[%s2 + $0x10] sm:$0xf]
        %v786 = vld [vmem:[%s2 + $0x14] sm:$0xf]
        %v787 = vld [vmem:[%s2 + $0x18] sm:$0xf]
        %v788 = vld [vmem:[%s2 + $0x1c] sm:$0xf]
        %v789 = vld [vmem:[%s2 + $0x20] sm:$0xf]
        %v790 = vld [vmem:[%s2 + $0x24] sm:$0xf]
        %v791 = vld [vmem:[%s2 + $0x28] sm:$0xf]
        %v792 = vld [vmem:[%s2 + $0x2c] sm:$0xf]
        %v793 = vld [vmem:[%s3] sm:$0x1]
        %v795 = vperm.slane %v793, 0
        %v809 = vunpack.c.l.b16 %v781
        %v810 = vunpack.c.l.b16 %v782
        %v811 = vunpack.c.l.b16 %v783
        %v812 = vunpack.c.l.b16 %v784
        %v813 = vunpack.c.l.b16 %v785
        %v814 = vunpack.c.l.b16 %v786
        %v815 = vunpack.c.l.b16 %v787
        %v816 = vunpack.c.l.b16 %v788
        %v817 = vunpack.c.l.b16 %v789
        %v818 = vunpack.c.l.b16 %v790
        %v819 = vunpack.c.l.b16 %v791
        %v820 = vunpack.c.l.b16 %v792
        %v821 = vpack.c.b16 %v810, %v809
        %v822 = vpack.c.b16 %v812, %v811
        %v823 = vpack.c.b16 %v814, %v813
        %v824 = vpack.c.b16 %v816, %v815
        %v825 = vpack.c.b16 %v818, %v817
        %v826 = vpack.c.b16 %v820, %v819
        %vm833 = vcmask 785408
        %v835 = vsel %vm833, %v780, 0
        %837 = vmatpush.bf16.msra.mxu0 0
        %838 = vmatpush.bf16.msra.mxu0 0
        %839 = vmatpush.bf16.msra.mxu0 %v826
        %840 = vmatpush.bf16.msra.mxu0 %v825
        %841 = vmatpush.bf16.msra.mxu0 %v824
        %842 = vmatpush.bf16.msra.mxu0 %v823
        %843 = vmatpush.bf16.msra.mxu0 %v822
        %844 = vmatpush.bf16.msra.mxu0 %v821
        %845 = vmatmul.bf16.gmra.mxu0 %v835
        %v846 = vpop.f32.mrf.mxu0
        %v847 = vadd.f32 %v795, %v846
        %v848 = vpop.f32.mrf.mxu0
        %v849 = vadd.f32 %v795, %v848
        %850 = vdwg.mxu0
        %v851 = vtanh.pop %v847
        %v852 = vtanh.pop %v849
        %v853 = vmax.f32 %v851, %v852
        %v854 = vrot.slane %v853, 4
        %v855 = vmax.f32 %v853, %v854
        %v856 = vrot.slane %v855, 2
        %v857 = vmax.f32 %v855, %v856
        %v858 = vrot.slane %v857, 1
        %v859 = vmax.f32 %v857, %v858
        %v860 = vpack.c.bf16 %v859, %v859
        %v861 = vld [vmem:[%s4] sm:$0xf]
        %v862 = vld [vmem:[%s4 + $0x4] sm:$0xf]
        %v863 = vld [vmem:[%s4 + $0x8] sm:$0xf]
        %v864 = vld [vmem:[%s4 + $0xc] sm:$0xf]
        %v865 = vld [vmem:[%s4 + $0x10] sm:$0xf]
        %v866 = vld [vmem:[%s4 + $0x14] sm:$0xf]
        %v867 = vld [vmem:[%s4 + $0x18] sm:$0xf]
        %v868 = vld [vmem:[%s4 + $0x1c] sm:$0xf]
        %v869 = vld [vmem:[%s4 + $0x20] sm:$0xf]
        %v870 = vld [vmem:[%s4 + $0x24] sm:$0xf]
        %v871 = vld [vmem:[%s4 + $0x28] sm:$0xf]
        %v872 = vld [vmem:[%s4 + $0x2c] sm:$0xf]
        %v873 = vld [vmem:[%s4 + $0x30] sm:$0xf]
        %v874 = vld [vmem:[%s4 + $0x34] sm:$0xf]
        %v875 = vld [vmem:[%s4 + $0x38] sm:$0xf]
        %v876 = vld [vmem:[%s4 + $0x3c] sm:$0xf]
        %v877 = vld [vmem:[%s5] sm:$0x1]
        %v894 = vunpack.c.l.b16 %v861
        %v895 = vunpack.c.l.b16 %v862
        %v896 = vunpack.c.l.b16 %v863
        %v897 = vunpack.c.l.b16 %v864
        %v898 = vunpack.c.l.b16 %v865
        %v899 = vunpack.c.l.b16 %v866
        %v900 = vunpack.c.l.b16 %v867
        %v901 = vunpack.c.l.b16 %v868
        %v902 = vunpack.c.l.b16 %v869
        %v903 = vunpack.c.l.b16 %v870
        %v904 = vunpack.c.l.b16 %v871
        %v905 = vunpack.c.l.b16 %v872
        %v906 = vunpack.c.l.b16 %v873
        %v907 = vunpack.c.l.b16 %v874
        %v908 = vunpack.c.l.b16 %v875
        %v909 = vunpack.c.l.b16 %v876
        %v910 = vpack.c.b16 %v895, %v894
        %v911 = vpack.c.b16 %v897, %v896
        %v912 = vpack.c.b16 %v899, %v898
        %v913 = vpack.c.b16 %v901, %v900
        %v914 = vpack.c.b16 %v903, %v902
        %v915 = vpack.c.b16 %v905, %v904
        %v916 = vpack.c.b16 %v907, %v906
        %v917 = vpack.c.b16 %v909, %v908
        %926 = vmatpush.bf16.msra.mxu0 %v917
        %927 = vmatpush.bf16.msra.mxu0 %v916
        %928 = vmatpush.bf16.msra.mxu0 %v915
        %929 = vmatpush.bf16.msra.mxu0 %v914
        %930 = vmatpush.bf16.msra.mxu0 %v913
        %931 = vmatpush.bf16.msra.mxu0 %v912
        %932 = vmatpush.bf16.msra.mxu0 %v911
        %933 = vmatpush.bf16.msra.mxu0 %v910
        %934 = vmatmul.bf16.gmra.mxu0 %v860
        %v935 = vpop.f32.mrf.mxu0
        %v936 = vadd.f32 %v877, %v935
        %v937 = vpop.f32.mrf.mxu0
        %938 = vdwg.mxu0
        %939 = vst [vmem:[%s492] sm:$0x1] %v936
        %s940 = sand.u32 %s164, 1
        %s941 = scalar_lea.sflag [#allocation5], %s940
        %s942 = sand.u32 %s164, 1
        %s943 = scalar_lea.vmem [#allocation4], %s942
        // Predicated region
        $region121: #{tpu_custom_call.1} parent=111 // pred_check
          %p944 = pneg %p174
        $region122: #{tpu_custom_call.1} parent=111 // pred_check_branch
          %946 = sbr.rel (%p944) target = $region124
        $region123: #{tpu_custom_call.1} parent=111 // pred_region
          %948 = vsyncadd %s941, 0
          %s949 = scalar_lea.hbm %s6, %s20
          %s951 = sshll.u32 %s943, 4
          %s952 = int_to_ptr.vmem [resolvable:$true] %s951
          %s953 = sshll.u32 %s949, 4
          %s954 = int_to_ptr.hbm [resolvable:$true] %s953
          %956 = dma.vmem_to_hbm [thread:$0]  %s952, 16, %s954, %s941
        $region124: #{tpu_custom_call.1} parent=111 // pred_fallthru
          _
      $region112: #{tpu_custom_call.1} parent=5 // pred_fallthru
        _
      %p957 = scmp.le.s32.totalorder 2, %s15
      // Predicated region
      $region125: #{tpu_custom_call.1} parent=5 // pred_check
        %p958 = pneg %p957
      $region126: #{tpu_custom_call.1} parent=5 // pred_check_branch
        %960 = sbr.rel (%p958) target = $region128
      $region127: #{tpu_custom_call.1} parent=5 // pred_region
        %s961 = ssub.s32 %s15, 2
        // Predicated region
        $region129: #{tpu_custom_call.1} parent=127 // pred_check
          %p962 = pneg %p180
        $region130: #{tpu_custom_call.1} parent=127 // pred_check_branch
          %964 = sbr.rel (%p962) target = $region132
        $region131: #{tpu_custom_call.1} parent=127 // pred_region
          %s965 = sand.u32 %s165, 1
          %s966 = scalar_lea.sflag [#allocation5], %s965
          %s967 = sand.u32 %s165, 1
          %s968 = scalar_lea.vmem [#allocation4], %s967
          %970 = dma.done %s966, 16
        $region132: #{tpu_custom_call.1} parent=127 // pred_fallthru
          _
      $region128: #{tpu_custom_call.1} parent=5 // pred_fallthru
        _
    $region6: #{tpu_custom_call.1} parent=1 // loop_footer
      %s19 = sadd.s32 1, %s15
    $region7: #{tpu_custom_call.1} parent=1 // loop_footer_branch
      %14 = sbr.rel target = $region3
    $region8: #{tpu_custom_call.1} parent=1 // loop_exit
      _
    %971 = vsyncpa [#allocation5], 1
    %s972 = scalar_lea.sflag [#allocation5], 1
    %973 = vsyncpa %s972, 1

</llo_original>
